<compile_context>
chip_gen: v5e
topology: v5e:2x2
jax: 0.10.0
libtpu: 0.0.40
codegen_flags: <defaults>
</compile_context>

<pallas_src>
import math
from functools import lru_cache

import numpy as np
import jax
import jax.numpy as jnp
from jax.experimental import pallas as pl
from jax.experimental.pallas import tpu as pltpu

AA = "ARNDCQEGHILKMFPSTWYV"
AA_DICT = {aa: i + 1 for i, aa in enumerate(AA)}
VOCAB_SIZE = len(AA) + 1        # 21, index 0 is padding
V_PAD = 32                      # table rows padded to a sublane-friendly K
V_OUT_PAD = 128                 # onehot output lanes padded to a full vreg lane width
TILE_L = 256                    # sequence tile (rows per grid step)


def _encode_seq_np(seq: str, max_len=None):
    """SequenceIntEmbeddingLayer: string -> int tokens (host-side, numpy)."""
    ids = [AA_DICT[a] for a in seq]
    if max_len is not None:
        ids = ids[:max_len] + [0] * max(0, max_len - len(ids))
    return np.asarray(ids, dtype=np.int32)


def _bucket_len(L: int, tile_l: int) -> int:
    """Pad length to a power-of-2 number of tiles so calls hit the jit cache."""
    n_tiles = pl.next_power_of_2(pl.cdiv(max(L, 1), tile_l))
    return n_tiles * tile_l


def _pick_tile_l(d_pad: int) -> int:
    """Shrink the sequence tile for very large embed dims so the double-buffered
    output tile + table + bf16 one-hot stay well under the scoped VMEM budget
    (safe on v7x's smaller VMEM as well)."""
    tile_l = TILE_L
    budget = 8 << 20
    while tile_l > 8 and (2 * tile_l * d_pad * 4            # out tile, double-buffered f32
                          + tile_l * V_PAD * 2              # bf16 one-hot intermediate
                          + 2 * V_PAD * d_pad * 2) > budget:  # bf16 table, double-buffered
        tile_l //= 2
    return max(tile_l, 8)


# ----------------------------------------------------------------------------
# Pallas kernels
# ----------------------------------------------------------------------------
def _onehot_kernel(tok_ref, out_ref):
    # tok_ref: (TILE_L, 1) int32 ; out_ref: (TILE_L, V_OUT_PAD) float32
    tl, vp = out_ref.shape
    cols = jax.lax.broadcasted_iota(jnp.int32, (tl, vp), 1)
    out_ref[...] = (cols == tok_ref[...]).astype(jnp.float32)


def _learnable_kernel(tok_ref, table_ref, out_ref):
    # tok_ref: (TILE_L, 1) int32 ; table_ref: (V_PAD, D_PAD) bf16 (scale folded)
    # out_ref: (TILE_L, D_PAD) float32
    tl = out_ref.shape[0]
    vp = table_ref.shape[0]
    cols = jax.lax.broadcasted_iota(jnp.int32, (tl, vp), 1)
    onehot = (cols == tok_ref[...]).astype(jnp.bfloat16)     # exact in bf16
    out_ref[...] = jnp.dot(onehot, table_ref[...],
                           preferred_element_type=jnp.float32)


# ----------------------------------------------------------------------------
# Cached pallas_call builders (one compile per shape bucket)
# ----------------------------------------------------------------------------
@lru_cache(maxsize=None)
def _onehot_call(Lp: int, tile_l: int):
    return jax.jit(pl.pallas_call(
        _onehot_kernel,
        out_shape=jax.ShapeDtypeStruct((Lp, V_OUT_PAD), jnp.float32),
        grid_spec=pltpu.PrefetchScalarGridSpec(
            num_scalar_prefetch=0,
            grid=(Lp // tile_l,),
            in_specs=[pl.BlockSpec((tile_l, 1), lambda i: (i, 0))],
            out_specs=pl.BlockSpec((tile_l, V_OUT_PAD), lambda i: (i, 0)),
        ),
        compiler_params=pltpu.CompilerParams(dimension_semantics=("parallel",)),
    ))


@lru_cache(maxsize=None)
def _learnable_call(Lp: int, tile_l: int, d_pad: int):
    return jax.jit(pl.pallas_call(
        _learnable_kernel,
        out_shape=jax.ShapeDtypeStruct((Lp, d_pad), jnp.float32),
        grid_spec=pltpu.PrefetchScalarGridSpec(
            num_scalar_prefetch=0,
            grid=(Lp // tile_l,),
            in_specs=[
                pl.BlockSpec((tile_l, 1), lambda i: (i, 0)),
                pl.BlockSpec((V_PAD, d_pad), lambda i: (0, 0)),
            ],
            out_specs=pl.BlockSpec((tile_l, d_pad), lambda i: (i, 0)),
        ),
        compiler_params=pltpu.CompilerParams(dimension_semantics=("parallel",)),
    ))


# ----------------------------------------------------------------------------
# Wrappers
# ----------------------------------------------------------------------------
def _pad_tokens(tokens_np, Lp):
    tok_p = np.zeros((Lp, 1), dtype=np.int32)
    tok_p[: tokens_np.shape[0], 0] = tokens_np
    return jnp.asarray(tok_p)


def onehot_embedding(seq: str):
    """SequenceOnehotEmbeddingLayer.forward -> (L, 21) float32"""
    tokens = _encode_seq_np(seq)
    L = tokens.shape[0]
    Lp = _bucket_len(L, TILE_L)
    out = _onehot_call(Lp, TILE_L)(_pad_tokens(tokens, Lp))
    return out[:L, :VOCAB_SIZE]


def learnable_embedding(seq: str, table_scaled_bf16: jnp.ndarray, embed_dim: int):
    """SequenceLearnableEmbeddingLayer.forward -> (L, D) float32"""
    tokens = _encode_seq_np(seq)
    L = tokens.shape[0]
    v_pad, d_pad = table_scaled_bf16.shape
    tile_l = _pick_tile_l(d_pad)
    Lp = _bucket_len(L, tile_l)
    out = _learnable_call(Lp, tile_l, d_pad)(_pad_tokens(tokens, Lp),
                                             table_scaled_bf16)
    return out[:L, :embed_dim]


class SequenceEmbeddingLayer:
    def __init__(self, embed_format, embed_dim=None, key=None):
        self.embed_format = embed_format
        if embed_format == "onehot":
            self.embed_table = None
        elif embed_format == "learnable":
            if embed_dim is None:
                raise BaseException("embed_dim' of 'int' type is expected.")
            key = key if key is not None else jax.random.PRNGKey(0)
            table = jax.random.normal(key, (VOCAB_SIZE, embed_dim), dtype=jnp.float32)
            # nn.Embedding(padding_idx=0): padding row initialized to zeros
            table = table.at[0].set(0.0)
            self.embed_table = table          # unscaled f32 "parameter"
            self.embed_dim = embed_dim
            # Fold sqrt(D) once at init; pad to (V_PAD, ceil128(D)) so the MXU
            # K dim is aligned and the output stores are lane-dense; cast to
            # bf16 once (not per call).
            d_pad = max(128, ((embed_dim + 127) // 128) * 128)
            padded = jnp.zeros((V_PAD, d_pad), jnp.float32)
            padded = padded.at[:VOCAB_SIZE, :embed_dim].set(
                table * math.sqrt(embed_dim))
            self._table_scaled_bf16 = padded.astype(jnp.bfloat16)
        elif embed_format == "esm":
            # TODO(synk): 'esm' embed_format requires a pretrained ESM-2 transformer; not translated.
            raise NotImplementedError("esm path not translated (pretrained transformer)")
        else:
            raise NotImplementedError(f"'{embed_format}' not in 'onehot, learnable, esm'")

    def __call__(self, id, seq, requires_grad=None):
        if self.embed_format == "onehot":
            return onehot_embedding(seq)
        return learnable_embedding(seq, self._table_scaled_bf16, self.embed_dim)


if __name__ == "__main__":
    key = jax.random.PRNGKey(0)
    seq = "ARNDCQEGHILK"  # L = 12 amino acids
    tokens = jnp.asarray(_encode_seq_np(seq))

    # --- onehot path ---
    onehot_layer = SequenceEmbeddingLayer("onehot")
    oh = jax.block_until_ready(onehot_layer("P00001", seq))
    assert oh.shape == (len(seq), VOCAB_SIZE) and oh.dtype == jnp.float32
    oh_ref = jax.nn.one_hot(tokens, VOCAB_SIZE, dtype=jnp.float32)
    assert jnp.allclose(oh, oh_ref)

    # --- learnable path ---
    embed_dim = 8
    learn_layer = SequenceEmbeddingLayer("learnable", embed_dim=embed_dim, key=key)
    emb = jax.block_until_ready(learn_layer("P00001", seq))
    assert emb.shape == (len(seq), embed_dim) and emb.dtype == jnp.float32

    # exact reference given the (intentional) bf16 cast of the scaled table
    scaled_bf16 = (learn_layer.embed_table * math.sqrt(embed_dim)) \
        .astype(jnp.bfloat16).astype(jnp.float32)
    assert jnp.allclose(emb, scaled_bf16[tokens], atol=1e-6)
    # loose check against the full-precision f32 reference
    emb_ref_f32 = learn_layer.embed_table[tokens] * math.sqrt(embed_dim)
    assert jnp.allclose(emb, emb_ref_f32, rtol=1e-2, atol=1e-2)

    # second call with a different length hits the same compile bucket
    emb2 = jax.block_until_ready(learn_layer("P00002", seq[:7]))
    assert emb2.shape == (7, embed_dim)

    print("KERNEL_OK")
</pallas_src>

<mosaic_0001>
module attributes {stable_mosaic.version = 11 : i64} {
  func.func @_onehot_kernel(%arg0: i32, %arg1: memref<256x1xi32, #tpu.memory_space<vmem>>, %arg2: memref<256x128xf32, #tpu.memory_space<vmem>>) attributes {dimension_semantics = [#tpu.dimension_semantics<parallel>], iteration_bounds = array<i64: 1>, scalar_prefetch = 0 : i64, scratch_operands = 0 : i64, tpu.core_type = #tpu.core_type<tc>, window_params = [{transform_indices = @transform_0, window_bounds = array<i64: 256, 1>}, {transform_indices = @transform_1, window_bounds = array<i64: 256, 128>}]} {
    %0 = tpu.iota {dimensions = array<i32: 1>} : vector<256x128xi32>
    %c0 = arith.constant 0 : index
    %c0_0 = arith.constant 0 : index
    %1 = vector.load %arg1[%c0, %c0_0] : memref<256x1xi32, #tpu.memory_space<vmem>>, vector<256x1xi32>
    %2 = vector.broadcast %1 : vector<256x1xi32> to vector<256x128xi32>
    %3 = arith.cmpi eq, %0, %2 : vector<256x128xi32>
    %4 = arith.extui %3 : vector<256x128xi1> to vector<256x128xi32>
    %5 = arith.sitofp %4 : vector<256x128xi32> to vector<256x128xf32>
    %c0_1 = arith.constant 0 : index
    %c0_2 = arith.constant 0 : index
    %6 = vector.load %arg2[%c0_1, %c0_2] : memref<256x128xf32, #tpu.memory_space<vmem>>, vector<256x128xf32>
    tpu.vector_store %arg2[%c0_1, %c0_2], %5 {strides = array<i32>} : memref<256x128xf32, #tpu.memory_space<vmem>>, vector<256x128xf32>,
    return
  }
  func.func @transform_0(%arg0: i32) -> (i32, i32) {
    %c0_i32 = arith.constant 0 : i32
    %c0_i32_0 = arith.constant 0 : i32
    return %arg0, %c0_i32 : i32, i32
  }
  func.func @transform_1(%arg0: i32) -> (i32, i32) {
    %c0_i32 = arith.constant 0 : i32
    %c0_i32_0 = arith.constant 0 : i32
    return %arg0, %c0_i32 : i32, i32
  }
}

</mosaic_0001>

<llo_original>
// kernel: tpu_custom_call.1
$region0: #{tpu_custom_call.1}
  #allocation0 [shape = 'u32[]', space=smem, size = 0x4, offset = 0x4, fixed_abs, tag = 'smem constant byte address 0x4 - core index']
  #allocation1 [shape = 'u32[72,128]{1,0:T(1,128)}', space=vmem, size = 0x9000, scoped, tag = 'internal scratch']
  %s0 = inlined_call_operand.vmem [shape: s32[256,1], index: 0, kind: input, shape index: {}]
  %s1 = inlined_call_operand.hbm [shape: f32[256,128], index: 1, kind: output, shape index: {}]
  %s2 = sld [smem:[#allocation0]]
  $region14: #{tpu_custom_call.1} parent=0
    _
  %s4 = ssub.s32 1, %s2
  %s5 = scalar_select 0, %s4, %s2
  $region1: #{tpu_custom_call.1} parent=0
    #allocation2 [shape = 'u8[131072]{0}', space=vmem, size = 0x20000, scoped, tag = 'output window, operand 0, single buffered']
    #allocation3 [shape = 's32[1]{0}', space=sflag, size = 0x4, scoped, tag = 'scoped memory for tpu_custom_call.1']
    %6 = vsyncpa [#allocation3], 0
    // Predicated region
    $region2: #{tpu_custom_call.1} parent=1 // pred_check
      _
    $region3: #{tpu_custom_call.1} parent=1 // pred_check_branch
      %8 = sbr.rel (0) target = $region5
    $region4: #{tpu_custom_call.1} parent=1 // pred_region
      _
    $region5: #{tpu_custom_call.1} parent=1 // pred_fallthru
      _
    %v9 = vlaneseq
    %v10 = vand.u32 %v9, 127
    %v11 = vld [vmem:[%s0] sm:$0xff]
    %v12 = vld [vmem:[%s0 + $0x8] sm:$0xff]
    %v13 = vld [vmem:[%s0 + $0x10] sm:$0xff]
    %v14 = vld [vmem:[%s0 + $0x18] sm:$0xff]
    %v15 = vld [vmem:[%s0 + $0x20] sm:$0xff]
    %v16 = vld [vmem:[%s0 + $0x28] sm:$0xff]
    %v17 = vld [vmem:[%s0 + $0x30] sm:$0xff]
    %v18 = vld [vmem:[%s0 + $0x38] sm:$0xff]
    %v19 = vld [vmem:[%s0 + $0x40] sm:$0xff]
    %v20 = vld [vmem:[%s0 + $0x48] sm:$0xff]
    %v21 = vld [vmem:[%s0 + $0x50] sm:$0xff]
    %v22 = vld [vmem:[%s0 + $0x58] sm:$0xff]
    %v23 = vld [vmem:[%s0 + $0x60] sm:$0xff]
    %v24 = vld [vmem:[%s0 + $0x68] sm:$0xff]
    %v25 = vld [vmem:[%s0 + $0x70] sm:$0xff]
    %v26 = vld [vmem:[%s0 + $0x78] sm:$0xff]
    %v27 = vld [vmem:[%s0 + $0x80] sm:$0xff]
    %v28 = vld [vmem:[%s0 + $0x88] sm:$0xff]
    %v29 = vld [vmem:[%s0 + $0x90] sm:$0xff]
    %v30 = vld [vmem:[%s0 + $0x98] sm:$0xff]
    %v31 = vld [vmem:[%s0 + $0xa0] sm:$0xff]
    %v32 = vld [vmem:[%s0 + $0xa8] sm:$0xff]
    %v33 = vld [vmem:[%s0 + $0xb0] sm:$0xff]
    %v34 = vld [vmem:[%s0 + $0xb8] sm:$0xff]
    %v35 = vld [vmem:[%s0 + $0xc0] sm:$0xff]
    %v36 = vld [vmem:[%s0 + $0xc8] sm:$0xff]
    %v37 = vld [vmem:[%s0 + $0xd0] sm:$0xff]
    %v38 = vld [vmem:[%s0 + $0xd8] sm:$0xff]
    %v39 = vld [vmem:[%s0 + $0xe0] sm:$0xff]
    %v40 = vld [vmem:[%s0 + $0xe8] sm:$0xff]
    %v41 = vld [vmem:[%s0 + $0xf0] sm:$0xff]
    %v42 = vld [vmem:[%s0 + $0xf8] sm:$0xff]
    %43 = vset.pattern.permute.xlu0 0
    %44 = vperm.xlu0 %43, %v11
    %v45 = vpop.permute.xlu0 %44
    %46 = vset.pattern.permute.xlu0 0
    %47 = vperm.xlu0 %46, %v12
    %v48 = vpop.permute.xlu0 %47
    %49 = vset.pattern.permute.xlu0 0
    %50 = vperm.xlu0 %49, %v13
    %v51 = vpop.permute.xlu0 %50
    %52 = vset.pattern.permute.xlu0 0
    %53 = vperm.xlu0 %52, %v14
    %v54 = vpop.permute.xlu0 %53
    %55 = vset.pattern.permute.xlu0 0
    %56 = vperm.xlu0 %55, %v15
    %v57 = vpop.permute.xlu0 %56
    %58 = vset.pattern.permute.xlu0 0
    %59 = vperm.xlu0 %58, %v16
    %v60 = vpop.permute.xlu0 %59
    %61 = vset.pattern.permute.xlu0 0
    %62 = vperm.xlu0 %61, %v17
    %v63 = vpop.permute.xlu0 %62
    %64 = vset.pattern.permute.xlu0 0
    %65 = vperm.xlu0 %64, %v18
    %v66 = vpop.permute.xlu0 %65
    %67 = vset.pattern.permute.xlu0 0
    %68 = vperm.xlu0 %67, %v19
    %v69 = vpop.permute.xlu0 %68
    %70 = vset.pattern.permute.xlu0 0
    %71 = vperm.xlu0 %70, %v20
    %v72 = vpop.permute.xlu0 %71
    %73 = vset.pattern.permute.xlu0 0
    %74 = vperm.xlu0 %73, %v21
    %v75 = vpop.permute.xlu0 %74
    %76 = vset.pattern.permute.xlu0 0
    %77 = vperm.xlu0 %76, %v22
    %v78 = vpop.permute.xlu0 %77
    %79 = vset.pattern.permute.xlu0 0
    %80 = vperm.xlu0 %79, %v23
    %v81 = vpop.permute.xlu0 %80
    %82 = vset.pattern.permute.xlu0 0
    %83 = vperm.xlu0 %82, %v24
    %v84 = vpop.permute.xlu0 %83
    %85 = vset.pattern.permute.xlu0 0
    %86 = vperm.xlu0 %85, %v25
    %v87 = vpop.permute.xlu0 %86
    %88 = vset.pattern.permute.xlu0 0
    %89 = vperm.xlu0 %88, %v26
    %v90 = vpop.permute.xlu0 %89
    %91 = vset.pattern.permute.xlu0 0
    %92 = vperm.xlu0 %91, %v27
    %v93 = vpop.permute.xlu0 %92
    %94 = vset.pattern.permute.xlu0 0
    %95 = vperm.xlu0 %94, %v28
    %v96 = vpop.permute.xlu0 %95
    %97 = vset.pattern.permute.xlu0 0
    %98 = vperm.xlu0 %97, %v29
    %v99 = vpop.permute.xlu0 %98
    %100 = vset.pattern.permute.xlu0 0
    %101 = vperm.xlu0 %100, %v30
    %v102 = vpop.permute.xlu0 %101
    %103 = vset.pattern.permute.xlu0 0
    %104 = vperm.xlu0 %103, %v31
    %v105 = vpop.permute.xlu0 %104
    %106 = vset.pattern.permute.xlu0 0
    %107 = vperm.xlu0 %106, %v32
    %v108 = vpop.permute.xlu0 %107
    %109 = vset.pattern.permute.xlu0 0
    %110 = vperm.xlu0 %109, %v33
    %v111 = vpop.permute.xlu0 %110
    %112 = vset.pattern.permute.xlu0 0
    %113 = vperm.xlu0 %112, %v34
    %v114 = vpop.permute.xlu0 %113
    %115 = vset.pattern.permute.xlu0 0
    %116 = vperm.xlu0 %115, %v35
    %v117 = vpop.permute.xlu0 %116
    %118 = vset.pattern.permute.xlu0 0
    %119 = vperm.xlu0 %118, %v36
    %v120 = vpop.permute.xlu0 %119
    %121 = vset.pattern.permute.xlu0 0
    %122 = vperm.xlu0 %121, %v37
    %v123 = vpop.permute.xlu0 %122
    %124 = vset.pattern.permute.xlu0 0
    %125 = vperm.xlu0 %124, %v38
    %v126 = vpop.permute.xlu0 %125
    %127 = vset.pattern.permute.xlu0 0
    %128 = vperm.xlu0 %127, %v39
    %v129 = vpop.permute.xlu0 %128
    %130 = vset.pattern.permute.xlu0 0
    %131 = vperm.xlu0 %130, %v40
    %v132 = vpop.permute.xlu0 %131
    %133 = vset.pattern.permute.xlu0 0
    %134 = vperm.xlu0 %133, %v41
    %v135 = vpop.permute.xlu0 %134
    %136 = vset.pattern.permute.xlu0 0
    %137 = vperm.xlu0 %136, %v42
    %v138 = vpop.permute.xlu0 %137
    %vm139 = vcmp.eq.s32.totalorder %v10, %v45
    %vm140 = vcmp.eq.s32.totalorder %v10, %v48
    %vm141 = vcmp.eq.s32.totalorder %v10, %v51
    %vm142 = vcmp.eq.s32.totalorder %v10, %v54
    %vm143 = vcmp.eq.s32.totalorder %v10, %v57
    %vm144 = vcmp.eq.s32.totalorder %v10, %v60
    %vm145 = vcmp.eq.s32.totalorder %v10, %v63
    %vm146 = vcmp.eq.s32.totalorder %v10, %v66
    %vm147 = vcmp.eq.s32.totalorder %v10, %v69
    %vm148 = vcmp.eq.s32.totalorder %v10, %v72
    %vm149 = vcmp.eq.s32.totalorder %v10, %v75
    %vm150 = vcmp.eq.s32.totalorder %v10, %v78
    %vm151 = vcmp.eq.s32.totalorder %v10, %v81
    %vm152 = vcmp.eq.s32.totalorder %v10, %v84
    %vm153 = vcmp.eq.s32.totalorder %v10, %v87
    %vm154 = vcmp.eq.s32.totalorder %v10, %v90
    %vm155 = vcmp.eq.s32.totalorder %v10, %v93
    %vm156 = vcmp.eq.s32.totalorder %v10, %v96
    %vm157 = vcmp.eq.s32.totalorder %v10, %v99
    %vm158 = vcmp.eq.s32.totalorder %v10, %v102
    %vm159 = vcmp.eq.s32.totalorder %v10, %v105
    %vm160 = vcmp.eq.s32.totalorder %v10, %v108
    %vm161 = vcmp.eq.s32.totalorder %v10, %v111
    %vm162 = vcmp.eq.s32.totalorder %v10, %v114
    %vm163 = vcmp.eq.s32.totalorder %v10, %v117
    %vm164 = vcmp.eq.s32.totalorder %v10, %v120
    %vm165 = vcmp.eq.s32.totalorder %v10, %v123
    %vm166 = vcmp.eq.s32.totalorder %v10, %v126
    %vm167 = vcmp.eq.s32.totalorder %v10, %v129
    %vm168 = vcmp.eq.s32.totalorder %v10, %v132
    %vm169 = vcmp.eq.s32.totalorder %v10, %v135
    %vm170 = vcmp.eq.s32.totalorder %v10, %v138
    %v171 = vsel %vm139, 1, 0
    %v172 = vsel %vm140, 1, 0
    %v173 = vsel %vm141, 1, 0
    %v174 = vsel %vm142, 1, 0
    %v175 = vsel %vm143, 1, 0
    %v176 = vsel %vm144, 1, 0
    %v177 = vsel %vm145, 1, 0
    %v178 = vsel %vm146, 1, 0
    %v179 = vsel %vm147, 1, 0
    %v180 = vsel %vm148, 1, 0
    %v181 = vsel %vm149, 1, 0
    %v182 = vsel %vm150, 1, 0
    %v183 = vsel %vm151, 1, 0
    %v184 = vsel %vm152, 1, 0
    %v185 = vsel %vm153, 1, 0
    %v186 = vsel %vm154, 1, 0
    %v187 = vsel %vm155, 1, 0
    %v188 = vsel %vm156, 1, 0
    %v189 = vsel %vm157, 1, 0
    %v190 = vsel %vm158, 1, 0
    %v191 = vsel %vm159, 1, 0
    %v192 = vsel %vm160, 1, 0
    %v193 = vsel %vm161, 1, 0
    %v194 = vsel %vm162, 1, 0
    %v195 = vsel %vm163, 1, 0
    %v196 = vsel %vm164, 1, 0
    %v197 = vsel %vm165, 1, 0
    %v198 = vsel %vm166, 1, 0
    %v199 = vsel %vm167, 1, 0
    %v200 = vsel %vm168, 1, 0
    %v201 = vsel %vm169, 1, 0
    %v202 = vsel %vm170, 1, 0
    %v203 = vcvt.s32.f32 %v171
    %v204 = vcvt.s32.f32 %v172
    %v205 = vcvt.s32.f32 %v173
    %v206 = vcvt.s32.f32 %v174
    %v207 = vcvt.s32.f32 %v175
    %v208 = vcvt.s32.f32 %v176
    %v209 = vcvt.s32.f32 %v177
    %v210 = vcvt.s32.f32 %v178
    %v211 = vcvt.s32.f32 %v179
    %v212 = vcvt.s32.f32 %v180
    %v213 = vcvt.s32.f32 %v181
    %v214 = vcvt.s32.f32 %v182
    %v215 = vcvt.s32.f32 %v183
    %v216 = vcvt.s32.f32 %v184
    %v217 = vcvt.s32.f32 %v185
    %v218 = vcvt.s32.f32 %v186
    %v219 = vcvt.s32.f32 %v187
    %v220 = vcvt.s32.f32 %v188
    %v221 = vcvt.s32.f32 %v189
    %v222 = vcvt.s32.f32 %v190
    %v223 = vcvt.s32.f32 %v191
    %v224 = vcvt.s32.f32 %v192
    %v225 = vcvt.s32.f32 %v193
    %v226 = vcvt.s32.f32 %v194
    %v227 = vcvt.s32.f32 %v195
    %v228 = vcvt.s32.f32 %v196
    %v229 = vcvt.s32.f32 %v197
    %v230 = vcvt.s32.f32 %v198
    %v231 = vcvt.s32.f32 %v199
    %v232 = vcvt.s32.f32 %v200
    %v233 = vcvt.s32.f32 %v201
    %v234 = vcvt.s32.f32 %v202
    %235 = vst [vmem:[#allocation2] sm:$0xff] %v203
    %236 = vst [vmem:[#allocation2 + $0x8] sm:$0xff] %v204
    %237 = vst [vmem:[#allocation2 + $0x10] sm:$0xff] %v205
    %238 = vst [vmem:[#allocation2 + $0x18] sm:$0xff] %v206
    %239 = vst [vmem:[#allocation2 + $0x20] sm:$0xff] %v207
    %240 = vst [vmem:[#allocation2 + $0x28] sm:$0xff] %v208
    %241 = vst [vmem:[#allocation2 + $0x30] sm:$0xff] %v209
    %242 = vst [vmem:[#allocation2 + $0x38] sm:$0xff] %v210
    %243 = vst [vmem:[#allocation2 + $0x40] sm:$0xff] %v211
    %244 = vst [vmem:[#allocation2 + $0x48] sm:$0xff] %v212
    %245 = vst [vmem:[#allocation2 + $0x50] sm:$0xff] %v213
    %246 = vst [vmem:[#allocation2 + $0x58] sm:$0xff] %v214
    %247 = vst [vmem:[#allocation2 + $0x60] sm:$0xff] %v215
    %248 = vst [vmem:[#allocation2 + $0x68] sm:$0xff] %v216
    %249 = vst [vmem:[#allocation2 + $0x70] sm:$0xff] %v217
    %250 = vst [vmem:[#allocation2 + $0x78] sm:$0xff] %v218
    %251 = vst [vmem:[#allocation2 + $0x80] sm:$0xff] %v219
    %252 = vst [vmem:[#allocation2 + $0x88] sm:$0xff] %v220
    %253 = vst [vmem:[#allocation2 + $0x90] sm:$0xff] %v221
    %254 = vst [vmem:[#allocation2 + $0x98] sm:$0xff] %v222
    %255 = vst [vmem:[#allocation2 + $0xa0] sm:$0xff] %v223
    %256 = vst [vmem:[#allocation2 + $0xa8] sm:$0xff] %v224
    %257 = vst [vmem:[#allocation2 + $0xb0] sm:$0xff] %v225
    %258 = vst [vmem:[#allocation2 + $0xb8] sm:$0xff] %v226
    %259 = vst [vmem:[#allocation2 + $0xc0] sm:$0xff] %v227
    %260 = vst [vmem:[#allocation2 + $0xc8] sm:$0xff] %v228
    %261 = vst [vmem:[#allocation2 + $0xd0] sm:$0xff] %v229
    %262 = vst [vmem:[#allocation2 + $0xd8] sm:$0xff] %v230
    %263 = vst [vmem:[#allocation2 + $0xe0] sm:$0xff] %v231
    %264 = vst [vmem:[#allocation2 + $0xe8] sm:$0xff] %v232
    %265 = vst [vmem:[#allocation2 + $0xf0] sm:$0xff] %v233
    %266 = vst [vmem:[#allocation2 + $0xf8] sm:$0xff] %v234
    // Predicated region
    $region6: #{tpu_custom_call.1} parent=1 // pred_check
      _
    $region7: #{tpu_custom_call.1} parent=1 // pred_check_branch
      %268 = sbr.rel (0) target = $region9
    $region8: #{tpu_custom_call.1} parent=1 // pred_region
      %270 = vsyncadd [#allocation3], 0
      %s271 = sshll.u32 [#allocation2], 4
      %s272 = int_to_ptr.vmem [resolvable:$true] %s271
      %s273 = sshll.u32 %s1, 4
      %s274 = int_to_ptr.hbm [resolvable:$true] %s273
      %279 = dma.vmem_to_hbm [thread:$0]  %s272, 4096, %s274, [#allocation3], 128, 128, 8
    $region9: #{tpu_custom_call.1} parent=1 // pred_fallthru
      _
    // Predicated region
    $region10: #{tpu_custom_call.1} parent=1 // pred_check
      _
    $region11: #{tpu_custom_call.1} parent=1 // pred_check_branch
      %281 = sbr.rel (0) target = $region13
    $region12: #{tpu_custom_call.1} parent=1 // pred_region
      %283 = dma.done [#allocation3], 4096
    $region13: #{tpu_custom_call.1} parent=1 // pred_fallthru
      _
    %284 = vsyncpa [#allocation3], 1

</llo_original>
